<compile_context>
chip_gen: v6e
topology: v6e:2x2x1
jax: 0.10.0
libtpu: 0.0.40
codegen_flags: <defaults>
</compile_context>

<pallas_src>
import math

import jax
import jax.numpy as jnp
from jax import lax
from jax.experimental import pallas as pl
from jax.experimental.pallas import tpu as pltpu

# Full-precision f32 matmuls on both the Pallas side and the pure-JAX
# reference side, so the 1e-4 comparison is not dominated by XLA's default
# low-precision f32 matmul path.
jax.config.update("jax_default_matmul_precision", "highest")


def _round_up(x, m):
    return ((x + m - 1) // m) * m


def _largest_divisor(n, upper, multiple=1):
    """Largest d <= upper with n % d == 0 and d % multiple == 0 (or None)."""
    best = None
    for c in range(1, min(upper, n) + 1):
        if n % c == 0 and c % multiple == 0:
            best = c
    return best


def sdssm_block(x, w_sel, b_sel, w_B, A_dict, Lp_norm=1.2):
    """Pallas implementation of SDSSMBlock.forward.

    x:      (B, L, D) float32
    w_sel:  (K, D)    A_selector weight (PyTorch nn.Linear layout)
    b_sel:  (K,)      A_selector bias
    w_B:    (H, D)    B projection weight (no bias)
    A_dict: (H, H, K) dictionary of transition matrices
    returns (B, L, H)
    """
    Bsz, L, D = x.shape
    H = w_B.shape[0]
    K = w_sel.shape[0]
    Lp = float(Lp_norm)
    inv_Lp = -1.0 / Lp

    LB = Bsz * L
    C = H + K                       # fused projection columns: [u | sel]
    Cp = _round_up(C, 128)          # padded to a lane-dense multiple of 128

    # ---- one-time weight prep (tiny; no per-token transposes) --------------
    w_fused = jnp.zeros((D, Cp), jnp.float32)
    w_fused = w_fused.at[:, :H].set(jnp.transpose(w_B).astype(jnp.float32))
    w_fused = w_fused.at[:, H:C].set(jnp.transpose(w_sel).astype(jnp.float32))
    b_fused = jnp.zeros((1, Cp), jnp.float32)
    b_fused = b_fused.at[0, H:C].set(b_sel.astype(jnp.float32))
    adict = jnp.transpose(A_dict, (2, 0, 1)).astype(jnp.float32)      # (K, H, H)

    # x rows in natural B-major order: a free, contiguous view (no transpose).
    x_rows = x.reshape(LB, D).astype(jnp.float32)

    # ------------------ phase 1: time-parallel fused projection --------------
    # Row tile: multiple of 8, divides L*B, leaves >= 2 grid steps so v7x can
    # split the parallel axis across its 2 TensorCores.  On v6e/v5e the extra
    # grid steps cost ~0.35us each (negligible); raise vmem_limit_bytes and
    # the 1024-row cap together at production sizes.
    TR = _largest_divisor(LB, max(min(LB // 2, 1024), 1), multiple=8) or LB
    assert LB % TR == 0, "row tile must divide B*L (tail rows would be dropped)"
    assert TR % 8 == 0 or TR == LB

    def proj_kernel(x_ref, wf_ref, bf_ref, out_ref):
        xr = x_ref[...]                                               # (TR, D)
        z = jnp.dot(xr, wf_ref[...],
                    preferred_element_type=jnp.float32) + bf_ref[...]  # (TR, Cp)
        # Selector softmax over the K selector lanes, done with a full-width
        # lane mask (no tiny-K value slices, single lane-dense store).
        # Exact divide: approx reciprocal error would compound through the
        # recurrence against the 1e-4 tolerance.
        col = lax.broadcasted_iota(jnp.int32, (TR, Cp), 1)
        is_sel = jnp.logical_and(col >= H, col < C)
        sel_logits = jnp.where(is_sel, z, jnp.float32(-1e30))
        m = jnp.max(sel_logits, axis=-1, keepdims=True)
        e = jnp.where(is_sel, jnp.exp(sel_logits - m), 0.0)
        softm = e / jnp.sum(e, axis=-1, keepdims=True)
        # u columns keep z, sel columns get the softmax, pad columns stay 0.
        out_ref[...] = jnp.where(is_sel, softm, z)

    fused_rows = pl.pallas_call(
        proj_kernel,
        out_shape=jax.ShapeDtypeStruct((LB, Cp), jnp.float32),
        grid_spec=pltpu.PrefetchScalarGridSpec(
            num_scalar_prefetch=0,
            grid=(LB // TR,),
            in_specs=[
                pl.BlockSpec((TR, D), lambda r: (r, 0)),              # x rows
                pl.BlockSpec((D, Cp), lambda r: (0, 0)),              # fused W
                pl.BlockSpec((1, Cp), lambda r: (0, 0)),              # fused bias
            ],
            out_specs=pl.BlockSpec((TR, Cp), lambda r: (r, 0)),
        ),
        compiler_params=pltpu.CompilerParams(
            dimension_semantics=("parallel",),
            # Safe on every generation (v5e scoped default is only 16 MiB);
            # raise to ~64-96 MiB on v6e with larger TR at production sizes.
            vmem_limit_bytes=32 * 1024 * 1024),
    )(x_rows, w_fused, b_fused)

    fused = fused_rows.reshape(Bsz, L, Cp)      # free view (rows are B-major)

    # ------------------ phase 2: sequential recurrence -----------------------
    # Batch tile: recurrence is independent per batch row; keep >= 2 blocks
    # when possible so the "parallel" batch axis maps onto v7x's 2 TensorCores.
    TB = _largest_divisor(Bsz, max(Bsz // 2, 1)) or Bsz
    # Timestep chunk: full L here.  At large L pick a divisor (multiple of 8)
    # so the (TB, TL, Cp) block fits VMEM; the hidden state carries across
    # chunks in the VMEM scratch.
    TL = L
    assert Bsz % TB == 0 and L % TL == 0, "tiles must divide B and L"
    assert TL % 8 == 0 or TL == L

    def rec_kernel(fused_ref, adict_ref, out_ref, h_ref):
        # hidden_state = zeros at the first L-chunk of every batch block.
        # Correctness relies on the L axis being innermost + "arbitrary".
        @pl.when(pl.program_id(1) == 0)
        def _():
            h_ref[...] = jnp.zeros_like(h_ref)

        def step(t, h):
            blk = fused_ref[:, pl.ds(t, 1), :][:, 0, :]               # (TB, Cp)
            u_bt = blk[:, :H]                                         # (TB, H)

            # A[b] = sum_k sel[b, k] * A_dict[k].  adict_ref is indexed per
            # use (stays VMEM-resident; no hoisted copy to spill in the
            # unrolled loop).  K is tiny/static here.
            # TODO(synk): at production K/H move these MACs and the matvec
            # below onto the MXU (sel @ A_dict.reshape(K, H*H)) if profiling
            # shows the |A|**Lp EUP transcendentals are not the binding slot.
            def sel_k(k):                                             # (TB,1,1)
                return blk[:, H + k:H + k + 1][:, :, None]

            A = adict_ref[0][None, :, :] * sel_k(0)
            for k in range(1, K):
                A = A + adict_ref[k][None, :, :] * sel_k(k)           # (TB,H,H)

            # Column-wise Lp norm over n1; reciprocal folded into the power
            # and the normalisation fused into the update:
            #   (A / norm) @ h == A @ (h * norm**(-1/Lp-power form)).
            # (A zero column gives 0*inf=NaN, matching the reference's 0/0.)
            inv_norm = jnp.sum(jnp.abs(A) ** Lp, axis=1) ** inv_Lp    # (TB, H)
            h_scaled = h * inv_norm
            h_new = jnp.sum(A * h_scaled[:, None, :], axis=-1) + u_bt # (TB, H)
            out_ref[:, pl.ds(t, 1), :] = h_new[:, None, :]
            return h_new

        # Moderate unroll: keeps LLO scheduling visibility without exploding
        # live ranges / spills at production TL (don't fully unroll there).
        h_last = lax.fori_loop(0, TL, step, h_ref[...], unroll=min(TL, 8))
        h_ref[...] = h_last

    out = pl.pallas_call(
        rec_kernel,
        out_shape=jax.ShapeDtypeStruct((Bsz, L, H), jnp.float32),
        grid_spec=pltpu.PrefetchScalarGridSpec(
            num_scalar_prefetch=0,
            grid=(Bsz // TB, L // TL),
            in_specs=[
                # fused [u | sel] block in natural (B, L, .) layout.
                pl.BlockSpec((TB, TL, Cp), lambda bi, li: (bi, li, 0)),
                # Loop-invariant dictionary (constant index_map).  At
                # production sizes single-buffer it (pipeline_mode=Buffered(1))
                # to fit v7x's 64 MiB VMEM.
                pl.BlockSpec((K, H, H), lambda bi, li: (0, 0, 0)),
            ],
            out_specs=pl.BlockSpec((TB, TL, H), lambda bi, li: (bi, li, 0)),
            scratch_shapes=[pltpu.VMEM((TB, H), jnp.float32)],        # hidden carry
        ),
        compiler_params=pltpu.CompilerParams(
            dimension_semantics=("parallel", "arbitrary"),
            vmem_limit_bytes=32 * 1024 * 1024),
    )(fused, adict)

    return out                                                        # (B, L, H)


def sdssm_reference(x, w_sel, b_sel, w_B, A_dict, Lp=1.2):
    """Pure-JAX reference mirroring the PyTorch forward pass."""
    Bsz, L, D = x.shape
    H = w_B.shape[0]
    sel = jax.nn.softmax(x @ w_sel.T + b_sel, axis=-1)                # (B, L, K)
    u = x @ w_B.T                                                     # (B, L, H)
    h = jnp.zeros((Bsz, H), jnp.float32)
    outs = []
    for i in range(L):
        A = jnp.einsum('nmk,bk->bnm', A_dict, sel[:, i, :])
        norm = jnp.sum(jnp.abs(A) ** Lp, axis=1) ** (1.0 / Lp)
        T = A / norm[:, None, :]
        h = jnp.einsum('bnm,bm->bn', T, h) + u[:, i, :]
        outs.append(h)
    return jnp.stack(outs, axis=1)


if __name__ == "__main__":
    # small shapes consistent with the module: batch=2, seq=8, embed=32, hidden=32
    B, L, D, H, K = 2, 8, 32, 32, 2

    key = jax.random.PRNGKey(0)
    k1, k2, k3, k4, k5 = jax.random.split(key, 5)

    x = jax.random.normal(k1, (B, L, D), jnp.float32)
    w_sel = jax.random.normal(k2, (K, D), jnp.float32) * 0.1          # A_selector.weight
    b_sel = jax.random.normal(k3, (K,), jnp.float32) * 0.1            # A_selector.bias
    w_B = jax.random.normal(k4, (H, D), jnp.float32) * 0.1            # B.weight (no bias)
    # A_dict init matches the PyTorch initializer distribution (deterministic key)
    scale = 2.0 * math.sqrt(6.0) / math.sqrt(2.0 * H)
    shift = math.sqrt(6.0) / math.sqrt(2.0 * H)
    A_dict = jax.random.uniform(k5, (H, H, K), jnp.float32) * scale - shift

    out = sdssm_block(x, w_sel, b_sel, w_B, A_dict, Lp_norm=1.2)
    out = jax.block_until_ready(out)

    ref = sdssm_reference(x, w_sel, b_sel, w_B, A_dict, Lp=1.2)
    assert out.shape == (B, L, H)
    assert jnp.allclose(out, ref, atol=1e-4, rtol=1e-4), "mismatch vs reference"

    print("KERNEL_OK")
</pallas_src>

<mosaic_0001>
module attributes {stable_mosaic.version = 11 : i64} {
  func.func @proj_kernel(%arg0: i32, %arg1: memref<8x32xf32, #tpu.memory_space<vmem>>, %arg2: memref<32x128xf32, #tpu.memory_space<vmem>>, %arg3: memref<1x128xf32, #tpu.memory_space<vmem>>, %arg4: memref<8x128xf32, #tpu.memory_space<vmem>>) attributes {dimension_semantics = [#tpu.dimension_semantics<parallel>], iteration_bounds = array<i64: 2>, scalar_prefetch = 0 : i64, scratch_operands = 0 : i64, tpu.core_type = #tpu.core_type<tc>, window_params = [{transform_indices = @transform_0, window_bounds = array<i64: 8, 32>}, {pipeline_mode = #tpu.pipeline_mode<synchronous>, transform_indices = @transform_1, window_bounds = array<i64: 32, 128>}, {pipeline_mode = #tpu.pipeline_mode<synchronous>, transform_indices = @transform_2, window_bounds = array<i64: 1, 128>}, {transform_indices = @transform_3, window_bounds = array<i64: 8, 128>}]} {
    %c0 = arith.constant 0 : index
    %c0_0 = arith.constant 0 : index
    %0 = vector.load %arg1[%c0, %c0_0] : memref<8x32xf32, #tpu.memory_space<vmem>>, vector<8x32xf32>
    %c0_1 = arith.constant 0 : index
    %c0_2 = arith.constant 0 : index
    %1 = vector.load %arg2[%c0_1, %c0_2] : memref<32x128xf32, #tpu.memory_space<vmem>>, vector<32x128xf32>
    %cst = arith.constant dense<0.000000e+00> : vector<8x128xf32>
    %2 = tpu.matmul %0, %1, %cst {dimension_numbers = #tpu.dot_dimension_numbers<[1], [0], [0], [1], [0, 0, 1, 1], [], []>, precision = #tpu.contract_precision<fp32>} : vector<8x32xf32>, vector<32x128xf32>, vector<8x128xf32> -> vector<8x128xf32>
    %c0_3 = arith.constant 0 : index
    %c0_4 = arith.constant 0 : index
    %3 = vector.load %arg3[%c0_3, %c0_4] : memref<1x128xf32, #tpu.memory_space<vmem>>, vector<1x128xf32>
    %4 = vector.broadcast %3 : vector<1x128xf32> to vector<8x128xf32>
    %5 = arith.addf %2, %4 : vector<8x128xf32>
    %6 = tpu.iota {dimensions = array<i32: 1>} : vector<8x128xi32>
    %c32_i32 = arith.constant 32 : i32
    %7 = vector.broadcast %c32_i32 : i32 to vector<8x128xi32>
    %8 = arith.cmpi sge, %6, %7 : vector<8x128xi32>
    %c34_i32 = arith.constant 34 : i32
    %9 = vector.broadcast %c34_i32 : i32 to vector<8x128xi32>
    %10 = arith.cmpi slt, %6, %9 : vector<8x128xi32>
    %11 = arith.andi %8, %10 : vector<8x128xi1>
    %cst_5 = arith.constant -1.000000e+30 : f32
    %12 = vector.broadcast %cst_5 : f32 to vector<8x128xf32>
    %13 = arith.select %11, %5, %12 : vector<8x128xi1>, vector<8x128xf32>
    %cst_6 = arith.constant dense<0xFF800000> : vector<8xf32>
    %14 = vector.multi_reduction <maximumf>, %13, %cst_6 [1] : vector<8x128xf32> to vector<8xf32>
    %15 = vector.shape_cast %14 : vector<8xf32> to vector<8x1xf32>
    %16 = vector.broadcast %15 : vector<8x1xf32> to vector<8x128xf32>
    %17 = arith.subf %13, %16 : vector<8x128xf32>
    %18 = math.exp %17 : vector<8x128xf32>
    %cst_7 = arith.constant 0.000000e+00 : f32
    %19 = vector.broadcast %cst_7 : f32 to vector<8x128xf32>
    %20 = arith.select %11, %18, %19 : vector<8x128xi1>, vector<8x128xf32>
    %cst_8 = arith.constant dense<0.000000e+00> : vector<8xf32>
    %21 = vector.multi_reduction <add>, %20, %cst_8 [1] : vector<8x128xf32> to vector<8xf32>
    %22 = vector.shape_cast %21 : vector<8xf32> to vector<8x1xf32>
    %23 = vector.broadcast %22 : vector<8x1xf32> to vector<8x128xf32>
    %24 = arith.divf %20, %23 : vector<8x128xf32>
    %25 = arith.select %11, %24, %5 : vector<8x128xi1>, vector<8x128xf32>
    %c0_9 = arith.constant 0 : index
    %c0_10 = arith.constant 0 : index
    %26 = vector.load %arg4[%c0_9, %c0_10] : memref<8x128xf32, #tpu.memory_space<vmem>>, vector<8x128xf32>
    tpu.vector_store %arg4[%c0_9, %c0_10], %25 {strides = array<i32>} : memref<8x128xf32, #tpu.memory_space<vmem>>, vector<8x128xf32>,
    return
  }
  func.func @transform_0(%arg0: i32) -> (i32, i32) {
    %c0_i32 = arith.constant 0 : i32
    %c0_i32_0 = arith.constant 0 : i32
    return %arg0, %c0_i32 : i32, i32
  }
  func.func @transform_1(%arg0: i32) -> (i32, i32) {
    %c0_i32 = arith.constant 0 : i32
    %c0_i32_0 = arith.constant 0 : i32
    %c0_i32_1 = arith.constant 0 : i32
    return %c0_i32, %c0_i32_0 : i32, i32
  }
  func.func @transform_2(%arg0: i32) -> (i32, i32) {
    %c0_i32 = arith.constant 0 : i32
    %c0_i32_0 = arith.constant 0 : i32
    %c0_i32_1 = arith.constant 0 : i32
    return %c0_i32, %c0_i32_0 : i32, i32
  }
  func.func @transform_3(%arg0: i32) -> (i32, i32) {
    %c0_i32 = arith.constant 0 : i32
    %c0_i32_0 = arith.constant 0 : i32
    return %arg0, %c0_i32 : i32, i32
  }
}

</mosaic_0001>

<llo_original>
// kernel: tpu_custom_call.1
$region0: #{tpu_custom_call.1}
  #allocation0 [shape = 'u32[]', space=smem, size = 0x4, offset = 0x4, fixed_abs, tag = 'smem constant byte address 0x4 - core index']
  #allocation1 [shape = 'u32[144,128]{1,0:T(1,128)}', space=vmem, size = 0x12000, scoped, tag = 'internal scratch']
  %s0 = inlined_call_operand.hbm [shape: f32[16,32], index: 0, kind: input, shape index: {}]
  %s1 = inlined_call_operand.hbm [shape: f32[32,128], index: 1, kind: input, shape index: {}]
  %s2 = inlined_call_operand.vmem [shape: f32[1,128], index: 2, kind: input, shape index: {}]
  %s3 = inlined_call_operand.hbm [shape: f32[16,128], index: 3, kind: output, shape index: {}]
  %s4 = sld [smem:[#allocation0]]
  $region53: #{tpu_custom_call.1} parent=0
    _
  %s6 = ssub.s32 1, %s4
  %s7 = scalar_select 0, %s6, %s4
  $region1: #{tpu_custom_call.1} parent=0
    #allocation2 [shape = 'u8[8192]{0}', space=vmem, size = 0x2000, scoped, tag = 'input window, operand 0']
    #allocation3 [shape = 's32[2]{0}', space=sflag, size = 0x8, scoped, tag = 'scoped memory for tpu_custom_call.1']
    #allocation4 [shape = 's32[2]{0}', space=sflag, size = 0x8, scoped, tag = 'scoped memory for tpu_custom_call.1']
    #allocation5 [shape = 'u8[16384]{0}', space=vmem, size = 0x4000, scoped, tag = 'input window, operand 1, single buffered']
    #allocation6 [shape = 's32[1]{0}', space=sflag, size = 0x4, scoped, tag = 'scoped memory for tpu_custom_call.1']
    #allocation7 [shape = 'u8[8192]{0}', space=vmem, size = 0x2000, scoped, tag = 'output window, operand 0']
    %8 = vsyncpa [#allocation3], 0
    %s9 = scalar_lea.sflag [#allocation3], 1
    %10 = vsyncpa %s9, 0
    %11 = vsyncpa [#allocation6], 0
    %12 = vsyncpa [#allocation4], 0
    %s13 = scalar_lea.sflag [#allocation4], 1
    %14 = vsyncpa %s13, 0
    loop: start=0, step=1, limit=4
    $region2: #{tpu_custom_call.1} parent=1 // loop_pre_header
      _
    $region3: #{tpu_custom_call.1} parent=1 // loop_header
      %s16 = sphi 0, %s20
      %p17 = scmp.ge.s32.totalorder %s16, 4
      %s26 = sphi 0, %s28
      %s29 = sphi 0, %s26
      %s30 = sphi 0, %s29
      %s46 = sphi 0, %s30
      %s50 = sphi 0, %s50
      %s52 = sphi 0, %s50
      %s53 = sphi 0, %s52
      %s67 = sphi 0, %s53
      %s71 = sphi 0, %s71
      %s73 = sphi 0, %s71
      %s74 = sphi 0, %s73
      %s88 = sphi 0, %s74
      %s94 = sphi 0, %s96
      %s97 = sphi 0, %s94
      %s98 = sphi 0, %s97
      %s114 = sphi 0, %s98
    $region4: #{tpu_custom_call.1} parent=1 // loop_header_branch
      %19 = sbr.rel (%p17) target = $region8
    $region5: #{tpu_custom_call.1} parent=1 // loop_body
      %s21 = ssub.s32 %s16, 1
      %s22 = ssub.s32 %s16, 2
      %s23 = sadd.s32 %s16, 1
      %s24 = ssub.s32 %s16, %s23
      %p25 = scmp.eq.s32.totalorder %s24, 0
      %s27 = sadd.s32 %s26, 1
      %s28 = scalar_select %p25, %s26, %s27
      %p31 = pneg %p25
      %p32 = scmp.eq.s32.totalorder %s16, 1
      %p33 = por %p31, %p32
      %p34 = scmp.ne.s32.totalorder %s26, %s29
      %p35 = scmp.eq.s32.totalorder %s16, 0
      %p36 = por %p34, %p35
      %p37 = scmp.ne.s32.totalorder %s26, %s29
      %p38 = scmp.eq.s32.totalorder %s21, 1
      %p39 = por %p37, %p38
      %p40 = scmp.ne.s32.totalorder %s29, %s30
      %p41 = scmp.eq.s32.totalorder %s21, 0
      %p42 = por %p40, %p41
      %p43 = scmp.ne.s32.totalorder %s29, %s30
      %p44 = scmp.eq.s32.totalorder %s22, 1
      %p45 = por %p43, %p44
      %p47 = scmp.ne.s32.totalorder %s30, %s46
      %p48 = scmp.eq.s32.totalorder %s22, 0
      %p49 = por %p47, %p48
      %s51 = sadd.s32 %s50, 1
      %p54 = scmp.eq.s32.totalorder %s16, 1
      %p55 = scmp.ne.s32.totalorder %s50, %s52
      %p56 = scmp.eq.s32.totalorder %s16, 0
      %p57 = por %p55, %p56
      %p58 = scmp.ne.s32.totalorder %s50, %s52
      %p59 = scmp.eq.s32.totalorder %s21, 1
      %p60 = por %p58, %p59
      %p61 = scmp.ne.s32.totalorder %s52, %s53
      %p62 = scmp.eq.s32.totalorder %s21, 0
      %p63 = por %p61, %p62
      %p64 = scmp.ne.s32.totalorder %s52, %s53
      %p65 = scmp.eq.s32.totalorder %s22, 1
      %p66 = por %p64, %p65
      %p68 = scmp.ne.s32.totalorder %s53, %s67
      %p69 = scmp.eq.s32.totalorder %s22, 0
      %p70 = por %p68, %p69
      %s72 = sadd.s32 %s71, 1
      %p75 = scmp.eq.s32.totalorder %s16, 1
      %p76 = scmp.ne.s32.totalorder %s71, %s73
      %p77 = scmp.eq.s32.totalorder %s16, 0
      %p78 = por %p76, %p77
      %p79 = scmp.ne.s32.totalorder %s71, %s73
      %p80 = scmp.eq.s32.totalorder %s21, 1
      %p81 = por %p79, %p80
      %p82 = scmp.ne.s32.totalorder %s73, %s74
      %p83 = scmp.eq.s32.totalorder %s21, 0
      %p84 = por %p82, %p83
      %p85 = scmp.ne.s32.totalorder %s73, %s74
      %p86 = scmp.eq.s32.totalorder %s22, 1
      %p87 = por %p85, %p86
      %p89 = scmp.ne.s32.totalorder %s74, %s88
      %p90 = scmp.eq.s32.totalorder %s22, 0
      %p91 = por %p89, %p90
      %s92 = ssub.s32 %s16, %s23
      %p93 = scmp.eq.s32.totalorder %s92, 0
      %s95 = sadd.s32 %s94, 1
      %s96 = scalar_select %p93, %s94, %s95
      %p99 = pneg %p93
      %p100 = scmp.eq.s32.totalorder %s16, 1
      %p101 = por %p99, %p100
      %p102 = scmp.ne.s32.totalorder %s94, %s97
      %p103 = scmp.eq.s32.totalorder %s16, 0
      %p104 = por %p102, %p103
      %p105 = scmp.ne.s32.totalorder %s94, %s97
      %p106 = scmp.eq.s32.totalorder %s21, 1
      %p107 = por %p105, %p106
      %p108 = scmp.ne.s32.totalorder %s97, %s98
      %p109 = scmp.eq.s32.totalorder %s21, 0
      %p110 = por %p108, %p109
      %p111 = scmp.ne.s32.totalorder %s97, %s98
      %p112 = scmp.eq.s32.totalorder %s22, 1
      %p113 = por %p111, %p112
      %p115 = scmp.ne.s32.totalorder %s98, %s114
      %p116 = scmp.eq.s32.totalorder %s22, 0
      %p117 = por %p115, %p116
      %p118 = scmp.le.s32.totalorder 1, %s16
      %p119 = scmp.lt.s32.totalorder %s16, 3
      %p120 = pnand %p118, %p119
      %p121 = pneg %p120
      // Predicated region
      $region9: #{tpu_custom_call.1} parent=5 // pred_check
        _
      $region10: #{tpu_custom_call.1} parent=5 // pred_check_branch
        %123 = sbr.rel (%p120) target = $region12
      $region11: #{tpu_custom_call.1} parent=5 // pred_region
        %s124 = ssub.s32 %s16, 1
        // Predicated region
        $region13: #{tpu_custom_call.1} parent=11 // pred_check
          %p125 = pneg %p63
        $region14: #{tpu_custom_call.1} parent=11 // pred_check_branch
          %127 = sbr.rel (%p125) target = $region16
        $region15: #{tpu_custom_call.1} parent=11 // pred_region
          %s129 = ssub.s32 512, 512
          %130 = vsyncadd [#allocation6], %s129
          %s131 = sshll.u32 [#allocation5], 4
          %s132 = int_to_ptr.vmem [resolvable:$true] %s131
          %137 = dma.hbm_to_vmem [thread:$0]  %s1, 512, %s132, [#allocation6], 128, 128, 8
        $region16: #{tpu_custom_call.1} parent=11 // pred_fallthru
          _
        // Predicated region
        $region17: #{tpu_custom_call.1} parent=11 // pred_check
          %p138 = pneg %p84
        $region18: #{tpu_custom_call.1} parent=11 // pred_check_branch
          %140 = sbr.rel (%p138) target = $region20
        $region19: #{tpu_custom_call.1} parent=11 // pred_region
          _
        $region20: #{tpu_custom_call.1} parent=11 // pred_fallthru
          _
      $region12: #{tpu_custom_call.1} parent=5 // pred_fallthru
        _
      %p141 = scmp.lt.s32.totalorder %s16, 2
      // Predicated region
      $region21: #{tpu_custom_call.1} parent=5 // pred_check
        %p142 = pneg %p141
      $region22: #{tpu_custom_call.1} parent=5 // pred_check_branch
        %144 = sbr.rel (%p142) target = $region24
      $region23: #{tpu_custom_call.1} parent=5 // pred_region
        // Predicated region
        $region25: #{tpu_custom_call.1} parent=23 // pred_check
          %p145 = pneg %p36
        $region26: #{tpu_custom_call.1} parent=23 // pred_check_branch
          %147 = sbr.rel (%p145) target = $region28
        $region27: #{tpu_custom_call.1} parent=23 // pred_region
          %s148 = sand.u32 %s26, 1
          %s149 = scalar_lea.sflag [#allocation3], %s148
          %s150 = sand.u32 %s26, 1
          %s151 = smul.addr %s150, 8
          %s152 = scalar_lea.vmem [#allocation2], %s151
          %s154 = ssub.s32 128, 128
          %155 = vsyncadd %s149, %s154
          %s156 = smul.addr %s16, 128
          %s157 = scalar_lea.hbm %s0, %s156
          %s159 = sshll.u32 %s152, 4
          %s160 = int_to_ptr.vmem [resolvable:$true] %s159
          %162 = dma.hbm_to_vmem [thread:$0]  %s157, 128, %s160, %s149
        $region28: #{tpu_custom_call.1} parent=23 // pred_fallthru
          _
      $region24: #{tpu_custom_call.1} parent=5 // pred_fallthru
        _
      %p163 = scmp.le.s32.totalorder 1, %s16
      %p164 = scmp.lt.s32.totalorder %s16, 3
      %p165 = pnand %p163, %p164
      %p166 = pneg %p165
      // Predicated region
      $region29: #{tpu_custom_call.1} parent=5 // pred_check
        _
      $region30: #{tpu_custom_call.1} parent=5 // pred_check_branch
        %168 = sbr.rel (%p165) target = $region32
      $region31: #{tpu_custom_call.1} parent=5 // pred_region
        %s169 = ssub.s32 %s16, 1
        %s170 = sand.u32 %s29, 1
        %s171 = scalar_lea.sflag [#allocation3], %s170
        %s172 = sand.u32 %s29, 1
        %s173 = smul.addr %s172, 8
        %s174 = scalar_lea.vmem [#allocation2], %s173
        // Predicated region
        $region33: #{tpu_custom_call.1} parent=31 // pred_check
          %p175 = pneg %p42
        $region34: #{tpu_custom_call.1} parent=31 // pred_check_branch
          %177 = sbr.rel (%p175) target = $region36
        $region35: #{tpu_custom_call.1} parent=31 // pred_region
          %178 = dma.done %s171, 128
        $region36: #{tpu_custom_call.1} parent=31 // pred_fallthru
          _
        // Predicated region
        $region37: #{tpu_custom_call.1} parent=31 // pred_check
          %p179 = pneg %p63
        $region38: #{tpu_custom_call.1} parent=31 // pred_check_branch
          %181 = sbr.rel (%p179) target = $region40
        $region39: #{tpu_custom_call.1} parent=31 // pred_region
          %182 = dma.done [#allocation6], 512
        $region40: #{tpu_custom_call.1} parent=31 // pred_fallthru
          _
        %s183 = sand.u32 %s29, 1
        %s184 = scalar_lea.sflag [#allocation3], %s183
        %s185 = sand.u32 %s29, 1
        %s186 = smul.addr %s185, 8
        %s187 = scalar_lea.vmem [#allocation2], %s186
        %p188 = pneg %p42
        %p189 = pneg %p39
        %p190 = pneg %p63
        %p191 = pneg %p60
        %p192 = pneg %p84
        %p193 = pneg %p81
        %p194 = pneg %p110
        %p195 = pneg %p107
        %s196 = sand.u32 %s97, 1
        %s197 = scalar_lea.sflag [#allocation4], %s196
        %s198 = sand.u32 %s97, 1
        %s199 = smul.addr %s198, 8
        %s200 = scalar_lea.vmem [#allocation7], %s199
        %v201 = vld [vmem:[%s174] sm:$0xff]
        %v202 = vld [vmem:[#allocation5] sm:$0xff]
        %v203 = vld [vmem:[#allocation5 + $0x8] sm:$0xff]
        %v204 = vld [vmem:[#allocation5 + $0x10] sm:$0xff]
        %v205 = vld [vmem:[#allocation5 + $0x18] sm:$0xff]
        %v206 = vld [vmem:[%s2] sm:$0x1]
        %v208 = vlaneseq
        %v209 = vshrl.u32 %v208, 7
        %v210 = vsub.s32 0, %v209
        %v211 = vrot.slane %v206, %v210
        %vm213 = vcmask 261120
        %v215 = vsel %vm213, %v201, 0
        %217 = vmatprep.subr.mxu0 0.0
        %218 = vmatpush1.msra.mxu0 0.0
        %219 = vmatprep.subr.mxu0 0.0
        %220 = vmatpush1.msra.mxu0 0.0
        %221 = vmatprep.subr.mxu0 0.0
        %222 = vmatpush1.msra.mxu0 0.0
        %223 = vmatprep.subr.mxu0 0.0
        %224 = vmatpush1.msra.mxu0 0.0
        %225 = vmatprep.subr.mxu0 0.0
        %226 = vmatpush1.msra.mxu0 0.0
        %227 = vmatprep.subr.mxu0 0.0
        %228 = vmatpush1.msra.mxu0 0.0
        %229 = vmatprep.subr.mxu0 0.0
        %230 = vmatpush1.msra.mxu0 0.0
        %231 = vmatprep.subr.mxu0 0.0
        %232 = vmatpush1.msra.mxu0 0.0
        %233 = vmatprep.subr.mxu0 0.0
        %234 = vmatpush1.msra.mxu0 0.0
        %235 = vmatprep.subr.mxu0 0.0
        %236 = vmatpush1.msra.mxu0 0.0
        %237 = vmatprep.subr.mxu0 0.0
        %238 = vmatpush1.msra.mxu0 0.0
        %239 = vmatprep.subr.mxu0 0.0
        %240 = vmatpush1.msra.mxu0 0.0
        %241 = vmatprep.subr.mxu0 0.0
        %v242 = vand.u32 %v205, 4294901760
        %243 = vmatpush1.msra.mxu0 %v242
        %244 = vmatprep.subr.mxu0 0.0
        %v245 = vand.u32 %v204, 4294901760
        %246 = vmatpush1.msra.mxu0 %v245
        %247 = vmatprep.subr.mxu0 0.0
        %v248 = vand.u32 %v203, 4294901760
        %249 = vmatpush1.msra.mxu0 %v248
        %250 = vmatprep.subr.mxu0 0.0
        %v251 = vand.u32 %v202, 4294901760
        %252 = vmatpush1.msra.mxu0 %v251
        %253 = vmatprep.subr.mxu0 0.0
        %254 = vmatpush2.msra.mxu0 0.0
        %255 = vmatprep.subr.mxu0 0.0
        %256 = vmatpush2.msra.mxu0 0.0
        %257 = vmatprep.subr.mxu0 0.0
        %258 = vmatpush2.msra.mxu0 0.0
        %259 = vmatprep.subr.mxu0 0.0
        %260 = vmatpush2.msra.mxu0 0.0
        %261 = vmatprep.subr.mxu0 0.0
        %262 = vmatpush2.msra.mxu0 0.0
        %263 = vmatprep.subr.mxu0 0.0
        %264 = vmatpush2.msra.mxu0 0.0
        %265 = vmatprep.subr.mxu0 0.0
        %266 = vmatpush2.msra.mxu0 0.0
        %267 = vmatprep.subr.mxu0 0.0
        %268 = vmatpush2.msra.mxu0 0.0
        %269 = vmatprep.subr.mxu0 0.0
        %270 = vmatpush2.msra.mxu0 0.0
        %271 = vmatprep.subr.mxu0 0.0
        %272 = vmatpush2.msra.mxu0 0.0
        %273 = vmatprep.subr.mxu0 0.0
        %274 = vmatpush2.msra.mxu0 0.0
        %275 = vmatprep.subr.mxu0 0.0
        %276 = vmatpush2.msra.mxu0 0.0
        %277 = vmatprep.subr.mxu0 0.0
        %278 = vmatpush2.msra.mxu0 0.0
        %279 = vmatprep.subr.mxu0 0.0
        %280 = vmatpush2.msra.mxu0 0.0
        %281 = vmatprep.subr.mxu0 0.0
        %282 = vmatpush2.msra.mxu0 0.0
        %283 = vmatprep.subr.mxu0 0.0
        %284 = vmatpush2.msra.mxu0 0.0
        %285 = vmatprep.mubr.f32.mxu0 0.0
        %v286 = vand.u32 %v215, 4294901760
        %v287 = vsub.f32 %v215, %v286
        %v288 = vand.u32 %v287, 4294901760
        %v289 = vsub.f32 %v287, %v288
        %v290 = vand.u32 %v289, 4294901760
        %291 = vmatmul.mubr.f32.gmra.mxu0 %v290
        %v292 = vpop.f32.mrf.mxu0
        %v293 = vadd.f32 %v211, %v292
        %v294 = vpop.f32.mrf.mxu0
        %295 = vdwg.mxu0
        %296 = vmatprep.subr.mxu0 0.0
        %297 = vmatpush1.msra.mxu0 0.0
        %298 = vmatprep.subr.mxu0 0.0
        %299 = vmatpush1.msra.mxu0 0.0
        %300 = vmatprep.subr.mxu0 0.0
        %301 = vmatpush1.msra.mxu0 0.0
        %302 = vmatprep.subr.mxu0 0.0
        %303 = vmatpush1.msra.mxu0 0.0
        %304 = vmatprep.subr.mxu0 0.0
        %305 = vmatpush1.msra.mxu0 0.0
        %306 = vmatprep.subr.mxu0 0.0
        %307 = vmatpush1.msra.mxu0 0.0
        %308 = vmatprep.subr.mxu0 0.0
        %309 = vmatpush1.msra.mxu0 0.0
        %310 = vmatprep.subr.mxu0 0.0
        %311 = vmatpush1.msra.mxu0 0.0
        %312 = vmatprep.subr.mxu0 0.0
        %313 = vmatpush1.msra.mxu0 0.0
        %314 = vmatprep.subr.mxu0 0.0
        %315 = vmatpush1.msra.mxu0 0.0
        %316 = vmatprep.subr.mxu0 0.0
        %317 = vmatpush1.msra.mxu0 0.0
        %318 = vmatprep.subr.mxu0 0.0
        %319 = vmatpush1.msra.mxu0 0.0
        %320 = vmatprep.subr.mxu0 0.0
        %v321 = vand.u32 %v205, 4294901760
        %v322 = vsub.f32 %v205, %v321
        %v323 = vand.u32 %v322, 4294901760
        %v324 = vsub.f32 %v322, %v323
        %v325 = vand.u32 %v324, 4294901760
        %326 = vmatpush1.msra.mxu0 %v325
        %327 = vmatprep.subr.mxu0 0.0
        %v328 = vand.u32 %v204, 4294901760
        %v329 = vsub.f32 %v204, %v328
        %v330 = vand.u32 %v329, 4294901760
        %v331 = vsub.f32 %v329, %v330
        %v332 = vand.u32 %v331, 4294901760
        %333 = vmatpush1.msra.mxu0 %v332
        %334 = vmatprep.subr.mxu0 0.0
        %v335 = vand.u32 %v203, 4294901760
        %v336 = vsub.f32 %v203, %v335
        %v337 = vand.u32 %v336, 4294901760
        %v338 = vsub.f32 %v336, %v337
        %v339 = vand.u32 %v338, 4294901760
        %340 = vmatpush1.msra.mxu0 %v339
        %341 = vmatprep.subr.mxu0 0.0
        %v342 = vand.u32 %v202, 4294901760
        %v343 = vsub.f32 %v202, %v342
        %v344 = vand.u32 %v343, 4294901760
        %v345 = vsub.f32 %v343, %v344
        %v346 = vand.u32 %v345, 4294901760
        %347 = vmatpush1.msra.mxu0 %v346
        %348 = vmatprep.subr.mxu0 0.0
        %349 = vmatpush2.msra.mxu0 0.0
        %350 = vmatprep.subr.mxu0 0.0
        %351 = vmatpush2.msra.mxu0 0.0
        %352 = vmatprep.subr.mxu0 0.0
        %353 = vmatpush2.msra.mxu0 0.0
        %354 = vmatprep.subr.mxu0 0.0
        %355 = vmatpush2.msra.mxu0 0.0
        %356 = vmatprep.subr.mxu0 0.0
        %357 = vmatpush2.msra.mxu0 0.0
        %358 = vmatprep.subr.mxu0 0.0
        %359 = vmatpush2.msra.mxu0 0.0
        %360 = vmatprep.subr.mxu0 0.0
        %361 = vmatpush2.msra.mxu0 0.0
        %362 = vmatprep.subr.mxu0 0.0
        %363 = vmatpush2.msra.mxu0 0.0
        %364 = vmatprep.subr.mxu0 0.0
        %365 = vmatpush2.msra.mxu0 0.0
        %366 = vmatprep.subr.mxu0 0.0
        %367 = vmatpush2.msra.mxu0 0.0
        %368 = vmatprep.subr.mxu0 0.0
        %369 = vmatpush2.msra.mxu0 0.0
        %370 = vmatprep.subr.mxu0 0.0
        %371 = vmatpush2.msra.mxu0 0.0
        %372 = vmatprep.subr.mxu0 0.0
        %373 = vmatpush2.msra.mxu0 0.0
        %374 = vmatprep.subr.mxu0 0.0
        %375 = vmatpush2.msra.mxu0 0.0
        %376 = vmatprep.subr.mxu0 0.0
        %377 = vmatpush2.msra.mxu0 0.0
        %378 = vmatprep.subr.mxu0 0.0
        %379 = vmatpush2.msra.mxu0 0.0
        %380 = vmatprep.mubr.f32.mxu0 0.0
        %v381 = vand.u32 %v215, 4294901760
        %382 = vmatmul.mubr.f32.gmra.mxu0 %v381
        %v383 = vpop.f32.mrf.mxu0
        %v384 = vadd.f32 %v293, %v383
        %v385 = vpop.f32.mrf.mxu0
        %386 = vdwg.mxu0
        %387 = vmatprep.subr.mxu0 0.0
        %388 = vmatpush1.msra.mxu0 0.0
        %389 = vmatprep.subr.mxu0 0.0
        %390 = vmatpush1.msra.mxu0 0.0
        %391 = vmatprep.subr.mxu0 0.0
        %392 = vmatpush1.msra.mxu0 0.0
        %393 = vmatprep.subr.mxu0 0.0
        %394 = vmatpush1.msra.mxu0 0.0
        %395 = vmatprep.subr.mxu0 0.0
        %396 = vmatpush1.msra.mxu0 0.0
        %397 = vmatprep.subr.mxu0 0.0
        %398 = vmatpush1.msra.mxu0 0.0
        %399 = vmatprep.subr.mxu0 0.0
        %400 = vmatpush1.msra.mxu0 0.0
        %401 = vmatprep.subr.mxu0 0.0
        %402 = vmatpush1.msra.mxu0 0.0
        %403 = vmatprep.subr.mxu0 0.0
        %404 = vmatpush1.msra.mxu0 0.0
        %405 = vmatprep.subr.mxu0 0.0
        %406 = vmatpush1.msra.mxu0 0.0
        %407 = vmatprep.subr.mxu0 0.0
        %408 = vmatpush1.msra.mxu0 0.0
        %409 = vmatprep.subr.mxu0 0.0
        %410 = vmatpush1.msra.mxu0 0.0
        %411 = vmatprep.subr.mxu0 0.0
        %v412 = vand.u32 %v205, 4294901760
        %v413 = vsub.f32 %v205, %v412
        %414 = vmatpush1.msra.mxu0 %v413
        %415 = vmatprep.subr.mxu0 0.0
        %v416 = vand.u32 %v204, 4294901760
        %v417 = vsub.f32 %v204, %v416
        %418 = vmatpush1.msra.mxu0 %v417
        %419 = vmatprep.subr.mxu0 0.0
        %v420 = vand.u32 %v203, 4294901760
        %v421 = vsub.f32 %v203, %v420
        %422 = vmatpush1.msra.mxu0 %v421
        %423 = vmatprep.subr.mxu0 0.0
        %v424 = vand.u32 %v202, 4294901760
        %v425 = vsub.f32 %v202, %v424
        %426 = vmatpush1.msra.mxu0 %v425
        %427 = vmatprep.subr.mxu0 0.0
        %428 = vmatpush2.msra.mxu0 0.0
        %429 = vmatprep.subr.mxu0 0.0
        %430 = vmatpush2.msra.mxu0 0.0
        %431 = vmatprep.subr.mxu0 0.0
        %432 = vmatpush2.msra.mxu0 0.0
        %433 = vmatprep.subr.mxu0 0.0
        %434 = vmatpush2.msra.mxu0 0.0
        %435 = vmatprep.subr.mxu0 0.0
        %436 = vmatpush2.msra.mxu0 0.0
        %437 = vmatprep.subr.mxu0 0.0
        %438 = vmatpush2.msra.mxu0 0.0
        %439 = vmatprep.subr.mxu0 0.0
        %440 = vmatpush2.msra.mxu0 0.0
        %441 = vmatprep.subr.mxu0 0.0
        %442 = vmatpush2.msra.mxu0 0.0
        %443 = vmatprep.subr.mxu0 0.0
        %444 = vmatpush2.msra.mxu0 0.0
        %445 = vmatprep.subr.mxu0 0.0
        %446 = vmatpush2.msra.mxu0 0.0
        %447 = vmatprep.subr.mxu0 0.0
        %448 = vmatpush2.msra.mxu0 0.0
        %449 = vmatprep.subr.mxu0 0.0
        %450 = vmatpush2.msra.mxu0 0.0
        %451 = vmatprep.subr.mxu0 0.0
        %452 = vmatpush2.msra.mxu0 0.0
        %453 = vmatprep.subr.mxu0 0.0
        %454 = vmatpush2.msra.mxu0 0.0
        %455 = vmatprep.subr.mxu0 0.0
        %456 = vmatpush2.msra.mxu0 0.0
        %457 = vmatprep.subr.mxu0 0.0
        %458 = vmatpush2.msra.mxu0 0.0
        %459 = vmatprep.mubr.f32.mxu0 0.0
        %v460 = vand.u32 %v215, 4294901760
        %v461 = vsub.f32 %v215, %v460
        %462 = vmatmul.mubr.f32.gmra.mxu0 %v461
        %v463 = vpop.f32.mrf.mxu0
        %v464 = vadd.f32 %v384, %v463
        %v465 = vpop.f32.mrf.mxu0
        %466 = vdwg.mxu0
        %467 = vmatprep.subr.mxu0 0.0
        %468 = vmatpush1.msra.mxu0 0.0
        %469 = vmatprep.subr.mxu0 0.0
        %470 = vmatpush1.msra.mxu0 0.0
        %471 = vmatprep.subr.mxu0 0.0
        %472 = vmatpush1.msra.mxu0 0.0
        %473 = vmatprep.subr.mxu0 0.0
        %474 = vmatpush1.msra.mxu0 0.0
        %475 = vmatprep.subr.mxu0 0.0
        %476 = vmatpush1.msra.mxu0 0.0
        %477 = vmatprep.subr.mxu0 0.0
        %478 = vmatpush1.msra.mxu0 0.0
        %479 = vmatprep.subr.mxu0 0.0
        %480 = vmatpush1.msra.mxu0 0.0
        %481 = vmatprep.subr.mxu0 0.0
        %482 = vmatpush1.msra.mxu0 0.0
        %483 = vmatprep.subr.mxu0 0.0
        %484 = vmatpush1.msra.mxu0 0.0
        %485 = vmatprep.subr.mxu0 0.0
        %486 = vmatpush1.msra.mxu0 0.0
        %487 = vmatprep.subr.mxu0 0.0
        %488 = vmatpush1.msra.mxu0 0.0
        %489 = vmatprep.subr.mxu0 0.0
        %490 = vmatpush1.msra.mxu0 0.0
        %491 = vmatprep.subr.mxu0 0.0
        %v492 = vand.u32 %v205, 4294901760
        %493 = vmatpush1.msra.mxu0 %v492
        %494 = vmatprep.subr.mxu0 0.0
        %v495 = vand.u32 %v204, 4294901760
        %496 = vmatpush1.msra.mxu0 %v495
        %497 = vmatprep.subr.mxu0 0.0
        %v498 = vand.u32 %v203, 4294901760
        %499 = vmatpush1.msra.mxu0 %v498
        %500 = vmatprep.subr.mxu0 0.0
        %v501 = vand.u32 %v202, 4294901760
        %502 = vmatpush1.msra.mxu0 %v501
        %503 = vmatprep.subr.mxu0 0.0
        %504 = vmatpush2.msra.mxu0 0.0
        %505 = vmatprep.subr.mxu0 0.0
        %506 = vmatpush2.msra.mxu0 0.0
        %507 = vmatprep.subr.mxu0 0.0
        %508 = vmatpush2.msra.mxu0 0.0
        %509 = vmatprep.subr.mxu0 0.0
        %510 = vmatpush2.msra.mxu0 0.0
        %511 = vmatprep.subr.mxu0 0.0
        %512 = vmatpush2.msra.mxu0 0.0
        %513 = vmatprep.subr.mxu0 0.0
        %514 = vmatpush2.msra.mxu0 0.0
        %515 = vmatprep.subr.mxu0 0.0
        %516 = vmatpush2.msra.mxu0 0.0
        %517 = vmatprep.subr.mxu0 0.0
        %518 = vmatpush2.msra.mxu0 0.0
        %519 = vmatprep.subr.mxu0 0.0
        %520 = vmatpush2.msra.mxu0 0.0
        %521 = vmatprep.subr.mxu0 0.0
        %522 = vmatpush2.msra.mxu0 0.0
        %523 = vmatprep.subr.mxu0 0.0
        %524 = vmatpush2.msra.mxu0 0.0
        %525 = vmatprep.subr.mxu0 0.0
        %526 = vmatpush2.msra.mxu0 0.0
        %527 = vmatprep.subr.mxu0 0.0
        %528 = vmatpush2.msra.mxu0 0.0
        %529 = vmatprep.subr.mxu0 0.0
        %530 = vmatpush2.msra.mxu0 0.0
        %531 = vmatprep.subr.mxu0 0.0
        %532 = vmatpush2.msra.mxu0 0.0
        %533 = vmatprep.subr.mxu0 0.0
        %534 = vmatpush2.msra.mxu0 0.0
        %535 = vmatprep.mubr.f32.mxu0 0.0
        %v536 = vand.u32 %v215, 4294901760
        %v537 = vsub.f32 %v215, %v536
        %v538 = vand.u32 %v537, 4294901760
        %539 = vmatmul.mubr.f32.gmra.mxu0 %v538
        %v540 = vpop.f32.mrf.mxu0
        %v541 = vadd.f32 %v464, %v540
        %v542 = vpop.f32.mrf.mxu0
        %543 = vdwg.mxu0
        %544 = vmatprep.subr.mxu0 0.0
        %545 = vmatpush1.msra.mxu0 0.0
        %546 = vmatprep.subr.mxu0 0.0
        %547 = vmatpush1.msra.mxu0 0.0
        %548 = vmatprep.subr.mxu0 0.0
        %549 = vmatpush1.msra.mxu0 0.0
        %550 = vmatprep.subr.mxu0 0.0
        %551 = vmatpush1.msra.mxu0 0.0
        %552 = vmatprep.subr.mxu0 0.0
        %553 = vmatpush1.msra.mxu0 0.0
        %554 = vmatprep.subr.mxu0 0.0
        %555 = vmatpush1.msra.mxu0 0.0
        %556 = vmatprep.subr.mxu0 0.0
        %557 = vmatpush1.msra.mxu0 0.0
        %558 = vmatprep.subr.mxu0 0.0
        %559 = vmatpush1.msra.mxu0 0.0
        %560 = vmatprep.subr.mxu0 0.0
        %561 = vmatpush1.msra.mxu0 0.0
        %562 = vmatprep.subr.mxu0 0.0
        %563 = vmatpush1.msra.mxu0 0.0
        %564 = vmatprep.subr.mxu0 0.0
        %565 = vmatpush1.msra.mxu0 0.0
        %566 = vmatprep.subr.mxu0 0.0
        %567 = vmatpush1.msra.mxu0 0.0
        %568 = vmatprep.subr.mxu0 0.0
        %v569 = vand.u32 %v205, 4294901760
        %v570 = vsub.f32 %v205, %v569
        %v571 = vand.u32 %v570, 4294901760
        %572 = vmatpush1.msra.mxu0 %v571
        %573 = vmatprep.subr.mxu0 0.0
        %v574 = vand.u32 %v204, 4294901760
        %v575 = vsub.f32 %v204, %v574
        %v576 = vand.u32 %v575, 4294901760
        %577 = vmatpush1.msra.mxu0 %v576
        %578 = vmatprep.subr.mxu0 0.0
        %v579 = vand.u32 %v203, 4294901760
        %v580 = vsub.f32 %v203, %v579
        %v581 = vand.u32 %v580, 4294901760
        %582 = vmatpush1.msra.mxu0 %v581
        %583 = vmatprep.subr.mxu0 0.0
        %v584 = vand.u32 %v202, 4294901760
        %v585 = vsub.f32 %v202, %v584
        %v586 = vand.u32 %v585, 4294901760
        %587 = vmatpush1.msra.mxu0 %v586
        %588 = vmatprep.subr.mxu0 0.0
        %589 = vmatpush2.msra.mxu0 0.0
        %590 = vmatprep.subr.mxu0 0.0
        %591 = vmatpush2.msra.mxu0 0.0
        %592 = vmatprep.subr.mxu0 0.0
        %593 = vmatpush2.msra.mxu0 0.0
        %594 = vmatprep.subr.mxu0 0.0
        %595 = vmatpush2.msra.mxu0 0.0
        %596 = vmatprep.subr.mxu0 0.0
        %597 = vmatpush2.msra.mxu0 0.0
        %598 = vmatprep.subr.mxu0 0.0
        %599 = vmatpush2.msra.mxu0 0.0
        %600 = vmatprep.subr.mxu0 0.0
        %601 = vmatpush2.msra.mxu0 0.0
        %602 = vmatprep.subr.mxu0 0.0
        %603 = vmatpush2.msra.mxu0 0.0
        %604 = vmatprep.subr.mxu0 0.0
        %605 = vmatpush2.msra.mxu0 0.0
        %606 = vmatprep.subr.mxu0 0.0
        %607 = vmatpush2.msra.mxu0 0.0
        %608 = vmatprep.subr.mxu0 0.0
        %609 = vmatpush2.msra.mxu0 0.0
        %610 = vmatprep.subr.mxu0 0.0
        %611 = vmatpush2.msra.mxu0 0.0
        %612 = vmatprep.subr.mxu0 0.0
        %613 = vmatpush2.msra.mxu0 0.0
        %614 = vmatprep.subr.mxu0 0.0
        %615 = vmatpush2.msra.mxu0 0.0
        %616 = vmatprep.subr.mxu0 0.0
        %617 = vmatpush2.msra.mxu0 0.0
        %618 = vmatprep.subr.mxu0 0.0
        %619 = vmatpush2.msra.mxu0 0.0
        %620 = vmatprep.mubr.f32.mxu0 0.0
        %v621 = vand.u32 %v215, 4294901760
        %622 = vmatmul.mubr.f32.gmra.mxu0 %v621
        %v623 = vpop.f32.mrf.mxu0
        %v624 = vadd.f32 %v541, %v623
        %v625 = vpop.f32.mrf.mxu0
        %626 = vdwg.mxu0
        %627 = vmatprep.subr.mxu0 0.0
        %628 = vmatpush1.msra.mxu0 0.0
        %629 = vmatprep.subr.mxu0 0.0
        %630 = vmatpush1.msra.mxu0 0.0
        %631 = vmatprep.subr.mxu0 0.0
        %632 = vmatpush1.msra.mxu0 0.0
        %633 = vmatprep.subr.mxu0 0.0
        %634 = vmatpush1.msra.mxu0 0.0
        %635 = vmatprep.subr.mxu0 0.0
        %636 = vmatpush1.msra.mxu0 0.0
        %637 = vmatprep.subr.mxu0 0.0
        %638 = vmatpush1.msra.mxu0 0.0
        %639 = vmatprep.subr.mxu0 0.0
        %640 = vmatpush1.msra.mxu0 0.0
        %641 = vmatprep.subr.mxu0 0.0
        %642 = vmatpush1.msra.mxu0 0.0
        %643 = vmatprep.subr.mxu0 0.0
        %644 = vmatpush1.msra.mxu0 0.0
        %645 = vmatprep.subr.mxu0 0.0
        %646 = vmatpush1.msra.mxu0 0.0
        %647 = vmatprep.subr.mxu0 0.0
        %648 = vmatpush1.msra.mxu0 0.0
        %649 = vmatprep.subr.mxu0 0.0
        %650 = vmatpush1.msra.mxu0 0.0
        %651 = vmatprep.subr.mxu0 0.0
        %v652 = vand.u32 %v205, 4294901760
        %653 = vmatpush1.msra.mxu0 %v652
        %654 = vmatprep.subr.mxu0 0.0
        %v655 = vand.u32 %v204, 4294901760
        %656 = vmatpush1.msra.mxu0 %v655
        %657 = vmatprep.subr.mxu0 0.0
        %v658 = vand.u32 %v203, 4294901760
        %659 = vmatpush1.msra.mxu0 %v658
        %660 = vmatprep.subr.mxu0 0.0
        %v661 = vand.u32 %v202, 4294901760
        %662 = vmatpush1.msra.mxu0 %v661
        %663 = vmatprep.subr.mxu0 0.0
        %664 = vmatpush2.msra.mxu0 0.0
        %665 = vmatprep.subr.mxu0 0.0
        %666 = vmatpush2.msra.mxu0 0.0
        %667 = vmatprep.subr.mxu0 0.0
        %668 = vmatpush2.msra.mxu0 0.0
        %669 = vmatprep.subr.mxu0 0.0
        %670 = vmatpush2.msra.mxu0 0.0
        %671 = vmatprep.subr.mxu0 0.0
        %672 = vmatpush2.msra.mxu0 0.0
        %673 = vmatprep.subr.mxu0 0.0
        %674 = vmatpush2.msra.mxu0 0.0
        %675 = vmatprep.subr.mxu0 0.0
        %676 = vmatpush2.msra.mxu0 0.0
        %677 = vmatprep.subr.mxu0 0.0
        %678 = vmatpush2.msra.mxu0 0.0
        %679 = vmatprep.subr.mxu0 0.0
        %680 = vmatpush2.msra.mxu0 0.0
        %681 = vmatprep.subr.mxu0 0.0
        %682 = vmatpush2.msra.mxu0 0.0
        %683 = vmatprep.subr.mxu0 0.0
        %684 = vmatpush2.msra.mxu0 0.0
        %685 = vmatprep.subr.mxu0 0.0
        %686 = vmatpush2.msra.mxu0 0.0
        %687 = vmatprep.subr.mxu0 0.0
        %688 = vmatpush2.msra.mxu0 0.0
        %689 = vmatprep.subr.mxu0 0.0
        %690 = vmatpush2.msra.mxu0 0.0
        %691 = vmatprep.subr.mxu0 0.0
        %692 = vmatpush2.msra.mxu0 0.0
        %693 = vmatprep.subr.mxu0 0.0
        %694 = vmatpush2.msra.mxu0 0.0
        %695 = vmatprep.mubr.f32.mxu0 0.0
        %v696 = vand.u32 %v215, 4294901760
        %697 = vmatmul.mubr.f32.gmra.mxu0 %v696
        %v698 = vpop.f32.mrf.mxu0
        %v699 = vadd.f32 %v624, %v698
        %v700 = vpop.f32.mrf.mxu0
        %701 = vdwg.mxu0
        %v702 = vlaneseq
        %v703 = vand.u32 %v702, 127
        %vm704 = vcmp.ge.s32.totalorder %v703, 32
        %vm705 = vcmp.lt.s32.totalorder %v703, 34
        %vm706 = vmand %vm704, %vm705
        %v707 = vsel %vm706, %v699, -1e+30
        %708 = vmax.xlane.f32.xlu0 %v707
        %v709 = vpop.xlane.xlu0 %708
        %v710 = vsub.f32 %v707, %v709
        %v711 = vmul.f32 %v710, 1.442695
        %v712 = vpow.pop %v711
        %v713 = vsel %vm706, %v712, 0.0
        %714 = vadd.xlane.f32.xlu0 %v713
        %v715 = vpop.xlane.xlu0 %714
        %v716 = vrcp.pop %v715
        %v717 = vmul.f32 %v713, %v716
        %v718 = vsel %vm706, %v717, %v699
        %719 = vst [vmem:[%s200] sm:$0xff] %v718
        %s720 = sand.u32 %s97, 1
        %s721 = scalar_lea.sflag [#allocation4], %s720
        %s722 = sand.u32 %s97, 1
        %s723 = smul.addr %s722, 8
        %s724 = scalar_lea.vmem [#allocation7], %s723
        // Predicated region
        $region41: #{tpu_custom_call.1} parent=31 // pred_check
          %p725 = pneg %p107
        $region42: #{tpu_custom_call.1} parent=31 // pred_check_branch
          %727 = sbr.rel (%p725) target = $region44
        $region43: #{tpu_custom_call.1} parent=31 // pred_region
          %s729 = ssub.s32 128, 128
          %730 = vsyncadd %s721, %s729
          %s731 = smul.addr %s21, 128
          %s732 = scalar_lea.hbm %s3, %s731
          %s734 = sshll.u32 %s724, 4
          %s735 = int_to_ptr.vmem [resolvable:$true] %s734
          %737 = dma.vmem_to_hbm [thread:$0]  %s735, 128, %s732, %s721
        $region44: #{tpu_custom_call.1} parent=31 // pred_fallthru
          _
      $region32: #{tpu_custom_call.1} parent=5 // pred_fallthru
        _
      %p738 = scmp.le.s32.totalorder 2, %s16
      // Predicated region
      $region45: #{tpu_custom_call.1} parent=5 // pred_check
        %p739 = pneg %p738
      $region46: #{tpu_custom_call.1} parent=5 // pred_check_branch
        %741 = sbr.rel (%p739) target = $region48
      $region47: #{tpu_custom_call.1} parent=5 // pred_region
        %s742 = ssub.s32 %s16, 2
        // Predicated region
        $region49: #{tpu_custom_call.1} parent=47 // pred_check
          %p743 = pneg %p113
        $region50: #{tpu_custom_call.1} parent=47 // pred_check_branch
          %745 = sbr.rel (%p743) target = $region52
        $region51: #{tpu_custom_call.1} parent=47 // pred_region
          %s746 = sand.u32 %s98, 1
          %s747 = scalar_lea.sflag [#allocation4], %s746
          %s748 = sand.u32 %s98, 1
          %s749 = smul.addr %s748, 8
          %s750 = scalar_lea.vmem [#allocation7], %s749
          %751 = dma.done %s747, 128
        $region52: #{tpu_custom_call.1} parent=47 // pred_fallthru
          _
      $region48: #{tpu_custom_call.1} parent=5 // pred_fallthru
        _
    $region6: #{tpu_custom_call.1} parent=1 // loop_footer
      %s20 = sadd.s32 1, %s16
    $region7: #{tpu_custom_call.1} parent=1 // loop_footer_branch
      %15 = sbr.rel target = $region3
    $region8: #{tpu_custom_call.1} parent=1 // loop_exit
      _
    %752 = vsyncpa [#allocation3], 1
    %s753 = scalar_lea.sflag [#allocation3], 1
    %754 = vsyncpa %s753, 1
    %755 = vsyncpa [#allocation6], 1
    %756 = vsyncpa [#allocation4], 1
    %s757 = scalar_lea.sflag [#allocation4], 1
    %758 = vsyncpa %s757, 1

</llo_original>
